<compile_context>
chip_gen: v5e
topology: v5e:2x2
jax: 0.10.0
libtpu: 0.0.40
codegen_flags: <defaults>
</compile_context>

<pallas_src>
import functools

import jax
import jax.numpy as jnp
from jax.experimental import pallas as pl
from jax.experimental.pallas import tpu as pltpu


def _gelu(x):
    # nn.GELU — tanh approximation for TPU-friendly lowering.
    return jax.nn.gelu(x, approximate=True)


def _mxu_dot(a, b):
    """bf16 MXU matmul with f32 accumulation (used by both kernels and reference)."""
    return jnp.dot(a.astype(jnp.bfloat16), b.astype(jnp.bfloat16),
                   preferred_element_type=jnp.float32)


def _round_up(x, m):
    return (x + m - 1) // m * m


def _pad_to(a, shape):
    return jnp.pad(a, [(0, t - s) for s, t in zip(a.shape, shape)])


# ----------------------------------------------------------------------------- kernels

def stem_kernel(xp_ref, w_ref, b_ref, pos_ref, o_ref):
    """Patch-embed stem (+ pos_embed):  out = patches @ W + b + pos."""
    xp = xp_ref[0]                                                     # (N, Pp) f32
    o_ref[0] = _mxu_dot(xp, w_ref[...]) + b_ref[...] + pos_ref[...]


def vig_block_kernel(x_ref, fc1w_ref, fc1b_ref, mrwt_ref, mrwb_ref, mrb_ref,
                     fc2w_ref, fc2b_ref, ffw1_ref, ffb1_ref, ffw2_ref, ffb2_ref,
                     o_ref, *, k):
    """One fused ViG block: Grapher (fc1 -> kNN + MRConv -> fc2 + residual) then FFN."""
    x = x_ref[0]                                                       # (N, Cp) f32

    # ---------------- Grapher ----------------
    h = _mxu_dot(x, fc1w_ref[...]) + fc1b_ref[...]                     # fc1 (1x1 conv)
    hb = h.astype(jnp.bfloat16)                                        # MXU operand copy

    # dense kNN graph on fc1 features: pairwise squared L2 distances (VPU math in f32)
    sq = jnp.sum(h * h, axis=-1, keepdims=True)                        # (N, 1)
    gram = jax.lax.dot_general(hb, hb, (((1,), (1,)), ((), ())),
                               preferred_element_type=jnp.float32)     # (N, N)
    d = sq + sq.T - 2.0 * gram                                         # (N, N)

    N = d.shape[0]
    j_iota = jax.lax.broadcasted_iota(jnp.int32, (N, N), 1)
    i_iota = jax.lax.broadcasted_iota(jnp.int32, (N, N), 0)

    # Self is always the nearest neighbour (distance ~0): fold it in directly
    # (agg = h), mask the diagonal and run only k-1 top-k iterations.
    d = jnp.where(i_iota == j_iota, jnp.inf, d)

    def knn_body(_, carry):
        d, agg = carry
        row_min = jnp.min(d, axis=-1, keepdims=True)                   # (N, 1)
        cand = jnp.where(d <= row_min, j_iota, N)                      # tie-break: smallest j
        jmin = jnp.min(cand, axis=-1, keepdims=True)                   # (N, 1)
        onehot = (j_iota == jmin).astype(jnp.bfloat16)                 # (N, N)
        gathered = jnp.dot(onehot, hb, preferred_element_type=jnp.float32)
        agg = jnp.maximum(agg, gathered)
        d = jnp.where(j_iota == jmin, jnp.inf, d)
        return d, agg

    _, agg = jax.lax.fori_loop(0, k - 1, knn_body, (d, h), unroll=True)
    max_rel = agg - h                                                  # max-relative features

    # MRConv "nn": Conv2d(2C -> 2C) on concat([h, max_rel]) + GELU, split into two
    # matmuls (avoids a lane-dim concatenate).
    y = (_mxu_dot(h, mrwt_ref[...]) + _mxu_dot(max_rel, mrwb_ref[...]) + mrb_ref[...])
    y = _gelu(y)

    # fc2 (1x1 conv, 2C -> C) + residual
    y = _mxu_dot(y, fc2w_ref[...]) + fc2b_ref[...]
    xg = y + x

    # ---------------- FFN ----------------
    hf = _gelu(_mxu_dot(xg, ffw1_ref[...]) + ffb1_ref[...])
    yf = _mxu_dot(hf, ffw2_ref[...]) + ffb2_ref[...]
    o_ref[0] = yf + xg


def head_kernel(x_ref, w_ref, b_ref, o_ref):
    """adaptive_avg_pool2d(x,1).squeeze() fused with the projection Linear."""
    feats = jnp.mean(x_ref[...], axis=1)                               # (B, Cp)
    o_ref[...] = _mxu_dot(feats, w_ref[...]) + b_ref[...]


# ----------------------------------------------------------------------------- wrappers

def run_stem(patches_p, w, b, pos):
    B, N, Pp = patches_p.shape
    Cp = w.shape[1]
    return pl.pallas_call(
        stem_kernel,
        out_shape=jax.ShapeDtypeStruct((B, N, Cp), jnp.float32),
        grid=(B,),
        in_specs=[
            pl.BlockSpec((1, N, Pp), lambda i: (i, 0, 0)),
            pl.BlockSpec((Pp, Cp), lambda i: (0, 0)),
            pl.BlockSpec((1, Cp), lambda i: (0, 0)),
            pl.BlockSpec((N, Cp), lambda i: (0, 0)),
        ],
        out_specs=pl.BlockSpec((1, N, Cp), lambda i: (i, 0, 0)),
        compiler_params=pltpu.CompilerParams(dimension_semantics=("parallel",)),
    )(patches_p, w, b, pos)


def run_block(x, blk, *, k):
    B, N, Cp = x.shape
    Hm = blk['mr_b'].shape[1]
    Hf = blk['ffn_b1'].shape[1]
    kernel = functools.partial(vig_block_kernel, k=k)
    return pl.pallas_call(
        kernel,
        out_shape=jax.ShapeDtypeStruct((B, N, Cp), jnp.float32),
        grid=(B,),
        in_specs=[
            pl.BlockSpec((1, N, Cp), lambda i: (i, 0, 0)),
            pl.BlockSpec((Cp, Cp), lambda i: (0, 0)),
            pl.BlockSpec((1, Cp), lambda i: (0, 0)),
            pl.BlockSpec((Cp, Hm), lambda i: (0, 0)),
            pl.BlockSpec((Cp, Hm), lambda i: (0, 0)),
            pl.BlockSpec((1, Hm), lambda i: (0, 0)),
            pl.BlockSpec((Hm, Cp), lambda i: (0, 0)),
            pl.BlockSpec((1, Cp), lambda i: (0, 0)),
            pl.BlockSpec((Cp, Hf), lambda i: (0, 0)),
            pl.BlockSpec((1, Hf), lambda i: (0, 0)),
            pl.BlockSpec((Hf, Cp), lambda i: (0, 0)),
            pl.BlockSpec((1, Cp), lambda i: (0, 0)),
        ],
        out_specs=pl.BlockSpec((1, N, Cp), lambda i: (i, 0, 0)),
        compiler_params=pltpu.CompilerParams(
            dimension_semantics=("parallel",),
            vmem_limit_bytes=64 * 1024 * 1024,
        ),
    )(x, blk['fc1_w'], blk['fc1_b'], blk['mr_w_top'], blk['mr_w_bot'], blk['mr_b'],
      blk['fc2_w'], blk['fc2_b'], blk['ffn_w1'], blk['ffn_b1'], blk['ffn_w2'], blk['ffn_b2'])


def run_head(x, w, b):
    B, N, Cp = x.shape
    Ep = w.shape[1]
    return pl.pallas_call(
        head_kernel,
        out_shape=jax.ShapeDtypeStruct((B, Ep), jnp.float32),
        grid=(1,),
        in_specs=[pl.BlockSpec((B, N, Cp), lambda i: (0, 0, 0)),
                  pl.BlockSpec((Cp, Ep), lambda i: (0, 0)),
                  pl.BlockSpec((1, Ep), lambda i: (0, 0))],
        out_specs=pl.BlockSpec((B, Ep), lambda i: (0, 0)),
    )(x, w, b)


# ----------------------------------------------------------------------------- glue

def extract_patches(x_nchw, patch):
    """NCHW image -> (B, N, patch*patch*Cin) non-overlapping patches (stem conv as matmul)."""
    B, Cin, H, W = x_nchw.shape
    x = jnp.transpose(x_nchw, (0, 2, 3, 1))                            # NHWC
    x = x.reshape(B, H // patch, patch, W // patch, patch, Cin)
    x = jnp.transpose(x, (0, 1, 3, 2, 4, 5))
    return x.reshape(B, (H // patch) * (W // patch), patch * patch * Cin)


def vig_feature_extractor(x_nchw, padded, *, k):
    """Forward pass of ViGFeatureExtractor:
       stem(x) + pos_embed -> backbone blocks -> global avg pool -> projection."""
    assert k >= 1
    patches = extract_patches(x_nchw, padded['patch'])
    extra = padded['Pp'] - patches.shape[-1]
    if extra:
        patches = jnp.pad(patches, ((0, 0), (0, 0), (0, extra)))       # lane-dense stem input
    x = run_stem(patches, padded['stem_w'], padded['stem_b'], padded['pos_embed'])
    for blk in padded['blocks']:
        x = run_block(x, blk, k=k)        # fused Grapher + FFN (one ViG block)
    feats = run_head(x, padded['proj_w'], padded['proj_b'])            # pool + projection
    return feats[:, :padded['embed']]


def init_params(key, *, in_ch, patch, C, n_blocks, N, embed):
    def nrm(k, shape, scale):
        return scale * jax.random.normal(k, shape, jnp.float32)

    keys = jax.random.split(key, 4 + n_blocks)
    P = patch * patch * in_ch
    params = dict(
        patch=patch,
        stem_w=nrm(keys[0], (P, C), 0.1),
        stem_b=jnp.zeros((1, C), jnp.float32),
        pos_embed=nrm(keys[1], (N, C), 0.02),
        proj_w=nrm(keys[2], (C, embed), 0.1),
        proj_b=jnp.zeros((1, embed), jnp.float32),
        blocks=[],
    )
    hidden = 4 * C
    for i in range(n_blocks):
        bk = jax.random.split(keys[3 + i], 5)
        params['blocks'].append(dict(
            fc1_w=nrm(bk[0], (C, C), 0.1),            fc1_b=jnp.zeros((1, C), jnp.float32),
            mr_w=nrm(bk[1], (2 * C, 2 * C), 0.1),     mr_b=jnp.zeros((1, 2 * C), jnp.float32),
            fc2_w=nrm(bk[2], (2 * C, C), 0.1),        fc2_b=jnp.zeros((1, C), jnp.float32),
            ffn_w1=nrm(bk[3], (C, hidden), 0.1),      ffn_b1=jnp.zeros((1, hidden), jnp.float32),
            ffn_w2=nrm(bk[4], (hidden, C), 0.1),      ffn_b2=jnp.zeros((1, C), jnp.float32),
        ))
    return params


def pad_params(params, lane=128):
    """Zero-pad channel dims to multiples of 128 (lane-dense) and pre-cast weights to bf16."""
    P, C = params['stem_w'].shape
    E = params['proj_w'].shape[1]
    N = params['pos_embed'].shape[0]
    Pp, Cp, Ep = _round_up(P, lane), _round_up(C, lane), _round_up(E, lane)
    padded = dict(
        patch=params['patch'], embed=E, Pp=Pp,
        stem_w=_pad_to(params['stem_w'], (Pp, Cp)).astype(jnp.bfloat16),
        stem_b=_pad_to(params['stem_b'], (1, Cp)),
        pos_embed=_pad_to(params['pos_embed'], (N, Cp)),
        proj_w=_pad_to(params['proj_w'], (Cp, Ep)).astype(jnp.bfloat16),
        proj_b=_pad_to(params['proj_b'], (1, Ep)),
        blocks=[],
    )
    for blk in params['blocks']:
        hid = blk['ffn_w1'].shape[1]
        Hm, Hf = _round_up(2 * C, lane), _round_up(hid, lane)
        padded['blocks'].append(dict(
            fc1_w=_pad_to(blk['fc1_w'], (Cp, Cp)).astype(jnp.bfloat16),
            fc1_b=_pad_to(blk['fc1_b'], (1, Cp)),
            mr_w_top=_pad_to(blk['mr_w'][:C], (Cp, Hm)).astype(jnp.bfloat16),
            mr_w_bot=_pad_to(blk['mr_w'][C:], (Cp, Hm)).astype(jnp.bfloat16),
            mr_b=_pad_to(blk['mr_b'], (1, Hm)),
            fc2_w=_pad_to(blk['fc2_w'], (Hm, Cp)).astype(jnp.bfloat16),
            fc2_b=_pad_to(blk['fc2_b'], (1, Cp)),
            ffn_w1=_pad_to(blk['ffn_w1'], (Cp, Hf)).astype(jnp.bfloat16),
            ffn_b1=_pad_to(blk['ffn_b1'], (1, Hf)),
            ffn_w2=_pad_to(blk['ffn_w2'], (Hf, Cp)).astype(jnp.bfloat16),
            ffn_b2=_pad_to(blk['ffn_b2'], (1, Cp)),
        ))
    return padded


# ----------------------------------------------------------------------------- pure-JAX reference
# Mirrors the kernel numerics (bf16 MXU matmuls, f32 distance math, self-folded kNN)
# on the *unpadded* logical parameters.

def _ref_grapher_single(x, blk, k):
    C = x.shape[-1]
    shortcut = x
    h = _mxu_dot(x, blk['fc1_w']) + blk['fc1_b']
    hb = h.astype(jnp.bfloat16)
    sq = jnp.sum(h * h, axis=-1, keepdims=True)
    gram = jnp.dot(hb, hb.T, preferred_element_type=jnp.float32)
    d = sq + sq.T - 2.0 * gram
    N = d.shape[0]
    j_iota = jax.lax.broadcasted_iota(jnp.int32, (N, N), 1)
    i_iota = jax.lax.broadcasted_iota(jnp.int32, (N, N), 0)
    d = jnp.where(i_iota == j_iota, jnp.inf, d)
    agg = h
    for _ in range(k - 1):
        row_min = jnp.min(d, axis=-1, keepdims=True)
        cand = jnp.where(d <= row_min, j_iota, N)
        jmin = jnp.min(cand, axis=-1, keepdims=True)
        onehot = (j_iota == jmin).astype(jnp.bfloat16)
        agg = jnp.maximum(agg, jnp.dot(onehot, hb, preferred_element_type=jnp.float32))
        d = jnp.where(j_iota == jmin, jnp.inf, d)
    max_rel = agg - h
    y = (_mxu_dot(h, blk['mr_w'][:C]) + _mxu_dot(max_rel, blk['mr_w'][C:]) + blk['mr_b'])
    y = _gelu(y)
    y = _mxu_dot(y, blk['fc2_w']) + blk['fc2_b']
    return y + shortcut


def reference_forward(x_nchw, params, *, k):
    patches = extract_patches(x_nchw, params['patch'])
    x = _mxu_dot(patches, params['stem_w']) + params['stem_b'] + params['pos_embed']
    for blk in params['blocks']:
        x = jax.vmap(lambda xb: _ref_grapher_single(xb, blk, k))(x)
        h = _gelu(_mxu_dot(x, blk['ffn_w1']) + blk['ffn_b1'])
        x = _mxu_dot(h, blk['ffn_w2']) + blk['ffn_b2'] + x
    feats = jnp.mean(x, axis=1)
    return _mxu_dot(feats, params['proj_w']) + params['proj_b']


# ----------------------------------------------------------------------------- main

if __name__ == "__main__":
    key = jax.random.PRNGKey(0)
    kx, kp = jax.random.split(key)

    B, Cin, H, W = 2, 3, 16, 16          # small RGB images
    PATCH, C, N_BLOCKS, K, EMBED = 4, 32, 2, 4, 16
    N_TOKENS = (H // PATCH) * (W // PATCH)

    x = jax.random.normal(kx, (B, Cin, H, W), jnp.float32)
    params = init_params(kp, in_ch=Cin, patch=PATCH, C=C,
                         n_blocks=N_BLOCKS, N=N_TOKENS, embed=EMBED)
    padded = pad_params(params)

    feats = vig_feature_extractor(x, padded, k=K)
    feats = jax.block_until_ready(feats)

    assert feats.shape == (B, EMBED), feats.shape
    assert bool(jnp.all(jnp.isfinite(feats)))

    ref = reference_forward(x, params, k=K)
    max_err = float(jnp.max(jnp.abs(feats - ref)))
    assert max_err < 2e-2, f"mismatch vs reference: {max_err}"

    print("KERNEL_OK")
</pallas_src>

<mosaic_0001>
module attributes {stable_mosaic.version = 11 : i64} {
  func.func @stem_kernel(%arg0: i32, %arg1: memref<1x16x128xf32, #tpu.memory_space<vmem>>, %arg2: memref<128x128xbf16, #tpu.memory_space<vmem>>, %arg3: memref<1x128xf32, #tpu.memory_space<vmem>>, %arg4: memref<16x128xf32, #tpu.memory_space<vmem>>, %arg5: memref<1x16x128xf32, #tpu.memory_space<vmem>>) attributes {dimension_semantics = [#tpu.dimension_semantics<parallel>], iteration_bounds = array<i64: 2>, scalar_prefetch = 0 : i64, scratch_operands = 0 : i64, tpu.core_type = #tpu.core_type<tc>, window_params = [{transform_indices = @transform_0, window_bounds = array<i64: 1, 16, 128>}, {pipeline_mode = #tpu.pipeline_mode<synchronous>, transform_indices = @transform_1, window_bounds = array<i64: 128, 128>}, {pipeline_mode = #tpu.pipeline_mode<synchronous>, transform_indices = @transform_2, window_bounds = array<i64: 1, 128>}, {pipeline_mode = #tpu.pipeline_mode<synchronous>, transform_indices = @transform_3, window_bounds = array<i64: 16, 128>}, {transform_indices = @transform_4, window_bounds = array<i64: 1, 16, 128>}]} {
    %c0 = arith.constant 0 : index
    %c0_0 = arith.constant 0 : index
    %c0_1 = arith.constant 0 : index
    %0 = vector.load %arg1[%c0, %c0_0, %c0_1] : memref<1x16x128xf32, #tpu.memory_space<vmem>>, vector<1x16x128xf32>
    %1 = vector.shape_cast %0 : vector<1x16x128xf32> to vector<16x128xf32>
    %c0_2 = arith.constant 0 : index
    %c0_3 = arith.constant 0 : index
    %2 = vector.load %arg2[%c0_2, %c0_3] : memref<128x128xbf16, #tpu.memory_space<vmem>>, vector<128x128xbf16>
    %3 = arith.truncf %1 : vector<16x128xf32> to vector<16x128xbf16>
    %cst = arith.constant dense<0.000000e+00> : vector<16x128xf32>
    %4 = tpu.matmul %3, %2, %cst {dimension_numbers = #tpu.dot_dimension_numbers<[1], [0], [0], [1], [0, 0, 1, 1], [], []>} : vector<16x128xbf16>, vector<128x128xbf16>, vector<16x128xf32> -> vector<16x128xf32>
    %c0_4 = arith.constant 0 : index
    %c0_5 = arith.constant 0 : index
    %5 = vector.load %arg3[%c0_4, %c0_5] : memref<1x128xf32, #tpu.memory_space<vmem>>, vector<1x128xf32>
    %6 = vector.broadcast %5 : vector<1x128xf32> to vector<16x128xf32>
    %7 = arith.addf %4, %6 : vector<16x128xf32>
    %c0_6 = arith.constant 0 : index
    %c0_7 = arith.constant 0 : index
    %8 = vector.load %arg4[%c0_6, %c0_7] : memref<16x128xf32, #tpu.memory_space<vmem>>, vector<16x128xf32>
    %9 = arith.addf %7, %8 : vector<16x128xf32>
    %c0_8 = arith.constant 0 : index
    %c0_9 = arith.constant 0 : index
    %c0_10 = arith.constant 0 : index
    %10 = vector.load %arg5[%c0_8, %c0_9, %c0_10] : memref<1x16x128xf32, #tpu.memory_space<vmem>>, vector<1x16x128xf32>
    %11 = vector.shape_cast %10 : vector<1x16x128xf32> to vector<16x128xf32>
    %12 = vector.shape_cast %9 : vector<16x128xf32> to vector<1x16x128xf32>
    tpu.vector_store %arg5[%c0_8, %c0_9, %c0_10], %12 {strides = array<i32>} : memref<1x16x128xf32, #tpu.memory_space<vmem>>, vector<1x16x128xf32>,
    return
  }
  func.func @transform_0(%arg0: i32) -> (i32, i32, i32) {
    %c0_i32 = arith.constant 0 : i32
    %c0_i32_0 = arith.constant 0 : i32
    %c0_i32_1 = arith.constant 0 : i32
    return %arg0, %c0_i32, %c0_i32_0 : i32, i32, i32
  }
  func.func @transform_1(%arg0: i32) -> (i32, i32) {
    %c0_i32 = arith.constant 0 : i32
    %c0_i32_0 = arith.constant 0 : i32
    %c0_i32_1 = arith.constant 0 : i32
    return %c0_i32, %c0_i32_0 : i32, i32
  }
  func.func @transform_2(%arg0: i32) -> (i32, i32) {
    %c0_i32 = arith.constant 0 : i32
    %c0_i32_0 = arith.constant 0 : i32
    %c0_i32_1 = arith.constant 0 : i32
    return %c0_i32, %c0_i32_0 : i32, i32
  }
  func.func @transform_3(%arg0: i32) -> (i32, i32) {
    %c0_i32 = arith.constant 0 : i32
    %c0_i32_0 = arith.constant 0 : i32
    %c0_i32_1 = arith.constant 0 : i32
    return %c0_i32, %c0_i32_0 : i32, i32
  }
  func.func @transform_4(%arg0: i32) -> (i32, i32, i32) {
    %c0_i32 = arith.constant 0 : i32
    %c0_i32_0 = arith.constant 0 : i32
    %c0_i32_1 = arith.constant 0 : i32
    return %arg0, %c0_i32, %c0_i32_0 : i32, i32, i32
  }
}

</mosaic_0001>

<llo_original>
// kernel: tpu_custom_call.1
$region0: #{tpu_custom_call.1}
  #allocation0 [shape = 'u32[]', space=smem, size = 0x4, offset = 0x4, fixed_abs, tag = 'smem constant byte address 0x4 - core index']
  #allocation1 [shape = 'u32[72,128]{1,0:T(1,128)}', space=vmem, size = 0x9000, scoped, tag = 'internal scratch']
  %s0 = inlined_call_operand.hbm [shape: f32[2,16,128], index: 0, kind: input, shape index: {}]
  %s1 = inlined_call_operand.hbm [shape: bf16[128,128], index: 1, kind: input, shape index: {}]
  %s2 = inlined_call_operand.vmem [shape: f32[1,128], index: 2, kind: input, shape index: {}]
  %s3 = inlined_call_operand.hbm [shape: f32[16,128], index: 3, kind: input, shape index: {}]
  %s4 = inlined_call_operand.hbm [shape: f32[2,16,128], index: 4, kind: output, shape index: {}]
  %s5 = sld [smem:[#allocation0]]
  $region61: #{tpu_custom_call.1} parent=0
    _
  %s7 = ssub.s32 1, %s5
  %s8 = scalar_select 0, %s7, %s5
  $region1: #{tpu_custom_call.1} parent=0
    #allocation2 [shape = 'u8[16384]{0}', space=vmem, size = 0x4000, scoped, tag = 'input window, operand 0']
    #allocation3 [shape = 's32[2]{0}', space=sflag, size = 0x8, scoped, tag = 'scoped memory for tpu_custom_call.1']
    #allocation4 [shape = 's32[2]{0}', space=sflag, size = 0x8, scoped, tag = 'scoped memory for tpu_custom_call.1']
    #allocation5 [shape = 'u8[32768]{0}', space=vmem, size = 0x8000, scoped, tag = 'input window, operand 1, single buffered']
    #allocation6 [shape = 's32[1]{0}', space=sflag, size = 0x4, scoped, tag = 'scoped memory for tpu_custom_call.1']
    #allocation7 [shape = 'u8[8192]{0}', space=vmem, size = 0x2000, scoped, tag = 'input window, operand 3, single buffered']
    #allocation8 [shape = 'u8[16384]{0}', space=vmem, size = 0x4000, scoped, tag = 'output window, operand 0']
    %9 = vsyncpa [#allocation3], 0
    %s10 = scalar_lea.sflag [#allocation3], 1
    %11 = vsyncpa %s10, 0
    %12 = vsyncpa [#allocation6], 0
    %13 = vsyncpa [#allocation4], 0
    %s14 = scalar_lea.sflag [#allocation4], 1
    %15 = vsyncpa %s14, 0
    loop: start=0, step=1, limit=4
    $region2: #{tpu_custom_call.1} parent=1 // loop_pre_header
      _
    $region3: #{tpu_custom_call.1} parent=1 // loop_header
      %s17 = sphi 0, %s21
      %p18 = scmp.ge.s32.totalorder %s17, 4
      %s27 = sphi 0, %s29
      %s30 = sphi 0, %s27
      %s31 = sphi 0, %s30
      %s47 = sphi 0, %s31
      %s51 = sphi 0, %s51
      %s53 = sphi 0, %s51
      %s54 = sphi 0, %s53
      %s68 = sphi 0, %s54
      %s72 = sphi 0, %s72
      %s74 = sphi 0, %s72
      %s75 = sphi 0, %s74
      %s89 = sphi 0, %s75
      %s93 = sphi 0, %s93
      %s95 = sphi 0, %s93
      %s96 = sphi 0, %s95
      %s110 = sphi 0, %s96
      %s116 = sphi 0, %s118
      %s119 = sphi 0, %s116
      %s120 = sphi 0, %s119
      %s136 = sphi 0, %s120
    $region4: #{tpu_custom_call.1} parent=1 // loop_header_branch
      %20 = sbr.rel (%p18) target = $region8
    $region5: #{tpu_custom_call.1} parent=1 // loop_body
      %s22 = ssub.s32 %s17, 1
      %s23 = ssub.s32 %s17, 2
      %s24 = sadd.s32 %s17, 1
      %s25 = ssub.s32 %s17, %s24
      %p26 = scmp.eq.s32.totalorder %s25, 0
      %s28 = sadd.s32 %s27, 1
      %s29 = scalar_select %p26, %s27, %s28
      %p32 = pneg %p26
      %p33 = scmp.eq.s32.totalorder %s17, 1
      %p34 = por %p32, %p33
      %p35 = scmp.ne.s32.totalorder %s27, %s30
      %p36 = scmp.eq.s32.totalorder %s17, 0
      %p37 = por %p35, %p36
      %p38 = scmp.ne.s32.totalorder %s27, %s30
      %p39 = scmp.eq.s32.totalorder %s22, 1
      %p40 = por %p38, %p39
      %p41 = scmp.ne.s32.totalorder %s30, %s31
      %p42 = scmp.eq.s32.totalorder %s22, 0
      %p43 = por %p41, %p42
      %p44 = scmp.ne.s32.totalorder %s30, %s31
      %p45 = scmp.eq.s32.totalorder %s23, 1
      %p46 = por %p44, %p45
      %p48 = scmp.ne.s32.totalorder %s31, %s47
      %p49 = scmp.eq.s32.totalorder %s23, 0
      %p50 = por %p48, %p49
      %s52 = sadd.s32 %s51, 1
      %p55 = scmp.eq.s32.totalorder %s17, 1
      %p56 = scmp.ne.s32.totalorder %s51, %s53
      %p57 = scmp.eq.s32.totalorder %s17, 0
      %p58 = por %p56, %p57
      %p59 = scmp.ne.s32.totalorder %s51, %s53
      %p60 = scmp.eq.s32.totalorder %s22, 1
      %p61 = por %p59, %p60
      %p62 = scmp.ne.s32.totalorder %s53, %s54
      %p63 = scmp.eq.s32.totalorder %s22, 0
      %p64 = por %p62, %p63
      %p65 = scmp.ne.s32.totalorder %s53, %s54
      %p66 = scmp.eq.s32.totalorder %s23, 1
      %p67 = por %p65, %p66
      %p69 = scmp.ne.s32.totalorder %s54, %s68
      %p70 = scmp.eq.s32.totalorder %s23, 0
      %p71 = por %p69, %p70
      %s73 = sadd.s32 %s72, 1
      %p76 = scmp.eq.s32.totalorder %s17, 1
      %p77 = scmp.ne.s32.totalorder %s72, %s74
      %p78 = scmp.eq.s32.totalorder %s17, 0
      %p79 = por %p77, %p78
      %p80 = scmp.ne.s32.totalorder %s72, %s74
      %p81 = scmp.eq.s32.totalorder %s22, 1
      %p82 = por %p80, %p81
      %p83 = scmp.ne.s32.totalorder %s74, %s75
      %p84 = scmp.eq.s32.totalorder %s22, 0
      %p85 = por %p83, %p84
      %p86 = scmp.ne.s32.totalorder %s74, %s75
      %p87 = scmp.eq.s32.totalorder %s23, 1
      %p88 = por %p86, %p87
      %p90 = scmp.ne.s32.totalorder %s75, %s89
      %p91 = scmp.eq.s32.totalorder %s23, 0
      %p92 = por %p90, %p91
      %s94 = sadd.s32 %s93, 1
      %p97 = scmp.eq.s32.totalorder %s17, 1
      %p98 = scmp.ne.s32.totalorder %s93, %s95
      %p99 = scmp.eq.s32.totalorder %s17, 0
      %p100 = por %p98, %p99
      %p101 = scmp.ne.s32.totalorder %s93, %s95
      %p102 = scmp.eq.s32.totalorder %s22, 1
      %p103 = por %p101, %p102
      %p104 = scmp.ne.s32.totalorder %s95, %s96
      %p105 = scmp.eq.s32.totalorder %s22, 0
      %p106 = por %p104, %p105
      %p107 = scmp.ne.s32.totalorder %s95, %s96
      %p108 = scmp.eq.s32.totalorder %s23, 1
      %p109 = por %p107, %p108
      %p111 = scmp.ne.s32.totalorder %s96, %s110
      %p112 = scmp.eq.s32.totalorder %s23, 0
      %p113 = por %p111, %p112
      %s114 = ssub.s32 %s17, %s24
      %p115 = scmp.eq.s32.totalorder %s114, 0
      %s117 = sadd.s32 %s116, 1
      %s118 = scalar_select %p115, %s116, %s117
      %p121 = pneg %p115
      %p122 = scmp.eq.s32.totalorder %s17, 1
      %p123 = por %p121, %p122
      %p124 = scmp.ne.s32.totalorder %s116, %s119
      %p125 = scmp.eq.s32.totalorder %s17, 0
      %p126 = por %p124, %p125
      %p127 = scmp.ne.s32.totalorder %s116, %s119
      %p128 = scmp.eq.s32.totalorder %s22, 1
      %p129 = por %p127, %p128
      %p130 = scmp.ne.s32.totalorder %s119, %s120
      %p131 = scmp.eq.s32.totalorder %s22, 0
      %p132 = por %p130, %p131
      %p133 = scmp.ne.s32.totalorder %s119, %s120
      %p134 = scmp.eq.s32.totalorder %s23, 1
      %p135 = por %p133, %p134
      %p137 = scmp.ne.s32.totalorder %s120, %s136
      %p138 = scmp.eq.s32.totalorder %s23, 0
      %p139 = por %p137, %p138
      %p140 = scmp.le.s32.totalorder 1, %s17
      %p141 = scmp.lt.s32.totalorder %s17, 3
      %p142 = pnand %p140, %p141
      %p143 = pneg %p142
      // Predicated region
      $region9: #{tpu_custom_call.1} parent=5 // pred_check
        _
      $region10: #{tpu_custom_call.1} parent=5 // pred_check_branch
        %145 = sbr.rel (%p142) target = $region12
      $region11: #{tpu_custom_call.1} parent=5 // pred_region
        %s146 = ssub.s32 %s17, 1
        // Predicated region
        $region13: #{tpu_custom_call.1} parent=11 // pred_check
          %p147 = pneg %p64
        $region14: #{tpu_custom_call.1} parent=11 // pred_check_branch
          %149 = sbr.rel (%p147) target = $region16
        $region15: #{tpu_custom_call.1} parent=11 // pred_region
          %151 = vsyncadd [#allocation6], 0
          %s152 = sshll.u32 %s1, 4
          %s153 = int_to_ptr.hbm [resolvable:$true] %s152
          %s154 = sshll.u32 [#allocation5], 4
          %s155 = int_to_ptr.vmem [resolvable:$true] %s154
          %160 = dma.hbm_to_vmem [thread:$0]  %s153, 1024, %s155, [#allocation6], 64, 64, 4
        $region16: #{tpu_custom_call.1} parent=11 // pred_fallthru
          _
        // Predicated region
        $region17: #{tpu_custom_call.1} parent=11 // pred_check
          %p161 = pneg %p85
        $region18: #{tpu_custom_call.1} parent=11 // pred_check_branch
          %163 = sbr.rel (%p161) target = $region20
        $region19: #{tpu_custom_call.1} parent=11 // pred_region
          _
        $region20: #{tpu_custom_call.1} parent=11 // pred_fallthru
          _
        // Predicated region
        $region21: #{tpu_custom_call.1} parent=11 // pred_check
          %p164 = pneg %p106
        $region22: #{tpu_custom_call.1} parent=11 // pred_check_branch
          %166 = sbr.rel (%p164) target = $region24
        $region23: #{tpu_custom_call.1} parent=11 // pred_region
          %168 = vsyncadd [#allocation6], 0
          %s169 = sshll.u32 %s3, 4
          %s170 = int_to_ptr.hbm [resolvable:$true] %s169
          %s171 = sshll.u32 [#allocation7], 4
          %s172 = int_to_ptr.vmem [resolvable:$true] %s171
          %177 = dma.hbm_to_vmem [thread:$0]  %s170, 256, %s172, [#allocation6], 128, 128, 8
        $region24: #{tpu_custom_call.1} parent=11 // pred_fallthru
          _
      $region12: #{tpu_custom_call.1} parent=5 // pred_fallthru
        _
      %p178 = scmp.lt.s32.totalorder %s17, 2
      // Predicated region
      $region25: #{tpu_custom_call.1} parent=5 // pred_check
        %p179 = pneg %p178
      $region26: #{tpu_custom_call.1} parent=5 // pred_check_branch
        %181 = sbr.rel (%p179) target = $region28
      $region27: #{tpu_custom_call.1} parent=5 // pred_region
        // Predicated region
        $region29: #{tpu_custom_call.1} parent=27 // pred_check
          %p182 = pneg %p37
        $region30: #{tpu_custom_call.1} parent=27 // pred_check_branch
          %184 = sbr.rel (%p182) target = $region32
        $region31: #{tpu_custom_call.1} parent=27 // pred_region
          %s185 = sand.u32 %s27, 1
          %s186 = scalar_lea.sflag [#allocation3], %s185
          %s187 = sand.u32 %s27, 1
          %s188 = smul.addr %s187, 16
          %s189 = scalar_lea.vmem [#allocation2], %s188
          %191 = vsyncadd %s186, 0
          %s192 = smul.addr %s17, 2
          %s193 = smul.addr %s192, 8
          %s194 = scalar_lea.hbm %s0, %s193
          %s195 = sshll.u32 %s194, 4
          %s196 = int_to_ptr.hbm [resolvable:$true] %s195
          %s197 = sshll.u32 %s189, 4
          %s198 = int_to_ptr.vmem [resolvable:$true] %s197
          %203 = dma.hbm_to_vmem [thread:$0]  %s196, 256, %s198, %s186, 128, 128, 8
        $region32: #{tpu_custom_call.1} parent=27 // pred_fallthru
          _
      $region28: #{tpu_custom_call.1} parent=5 // pred_fallthru
        _
      %p204 = scmp.le.s32.totalorder 1, %s17
      %p205 = scmp.lt.s32.totalorder %s17, 3
      %p206 = pnand %p204, %p205
      %p207 = pneg %p206
      // Predicated region
      $region33: #{tpu_custom_call.1} parent=5 // pred_check
        _
      $region34: #{tpu_custom_call.1} parent=5 // pred_check_branch
        %209 = sbr.rel (%p206) target = $region36
      $region35: #{tpu_custom_call.1} parent=5 // pred_region
        %s210 = ssub.s32 %s17, 1
        %s211 = sand.u32 %s30, 1
        %s212 = scalar_lea.sflag [#allocation3], %s211
        %s213 = sand.u32 %s30, 1
        %s214 = smul.addr %s213, 16
        %s215 = scalar_lea.vmem [#allocation2], %s214
        // Predicated region
        $region37: #{tpu_custom_call.1} parent=35 // pred_check
          %p216 = pneg %p43
        $region38: #{tpu_custom_call.1} parent=35 // pred_check_branch
          %218 = sbr.rel (%p216) target = $region40
        $region39: #{tpu_custom_call.1} parent=35 // pred_region
          %220 = dma.done %s212, 256
        $region40: #{tpu_custom_call.1} parent=35 // pred_fallthru
          _
        // Predicated region
        $region41: #{tpu_custom_call.1} parent=35 // pred_check
          %p221 = pneg %p64
        $region42: #{tpu_custom_call.1} parent=35 // pred_check_branch
          %223 = sbr.rel (%p221) target = $region44
        $region43: #{tpu_custom_call.1} parent=35 // pred_region
          %225 = dma.done [#allocation6], 1024
        $region44: #{tpu_custom_call.1} parent=35 // pred_fallthru
          _
        // Predicated region
        $region45: #{tpu_custom_call.1} parent=35 // pred_check
          %p226 = pneg %p106
        $region46: #{tpu_custom_call.1} parent=35 // pred_check_branch
          %228 = sbr.rel (%p226) target = $region48
        $region47: #{tpu_custom_call.1} parent=35 // pred_region
          %230 = dma.done [#allocation6], 256
        $region48: #{tpu_custom_call.1} parent=35 // pred_fallthru
          _
        %s231 = sand.u32 %s30, 1
        %s232 = scalar_lea.sflag [#allocation3], %s231
        %s233 = sand.u32 %s30, 1
        %s234 = smul.addr %s233, 16
        %s235 = scalar_lea.vmem [#allocation2], %s234
        %p236 = pneg %p43
        %p237 = pneg %p40
        %p238 = pneg %p64
        %p239 = pneg %p61
        %p240 = pneg %p85
        %p241 = pneg %p82
        %p242 = pneg %p106
        %p243 = pneg %p103
        %p244 = pneg %p132
        %p245 = pneg %p129
        %s246 = sand.u32 %s119, 1
        %s247 = scalar_lea.sflag [#allocation4], %s246
        %s248 = sand.u32 %s119, 1
        %s249 = smul.addr %s248, 16
        %s250 = scalar_lea.vmem [#allocation8], %s249
        %v251 = vld [vmem:[%s215] sm:$0xff]
        %v252 = vld [vmem:[%s215 + $0x8] sm:$0xff]
        %v253 = vld [vmem:[#allocation5] sm:$0xf]
        %v254 = vld [vmem:[#allocation5 + $0x4] sm:$0xf]
        %v255 = vld [vmem:[#allocation5 + $0x8] sm:$0xf]
        %v256 = vld [vmem:[#allocation5 + $0xc] sm:$0xf]
        %v257 = vld [vmem:[#allocation5 + $0x10] sm:$0xf]
        %v258 = vld [vmem:[#allocation5 + $0x14] sm:$0xf]
        %v259 = vld [vmem:[#allocation5 + $0x18] sm:$0xf]
        %v260 = vld [vmem:[#allocation5 + $0x1c] sm:$0xf]
        %v261 = vld [vmem:[#allocation5 + $0x20] sm:$0xf]
        %v262 = vld [vmem:[#allocation5 + $0x24] sm:$0xf]
        %v263 = vld [vmem:[#allocation5 + $0x28] sm:$0xf]
        %v264 = vld [vmem:[#allocation5 + $0x2c] sm:$0xf]
        %v265 = vld [vmem:[#allocation5 + $0x30] sm:$0xf]
        %v266 = vld [vmem:[#allocation5 + $0x34] sm:$0xf]
        %v267 = vld [vmem:[#allocation5 + $0x38] sm:$0xf]
        %v268 = vld [vmem:[#allocation5 + $0x3c] sm:$0xf]
        %v269 = vpack.c.bf16 %v252, %v251
        %v270 = vld [vmem:[%s2] sm:$0x1]
        %v272 = vperm.slane %v270, 0
        %v290 = vunpack.c.l.b16 %v253
        %v291 = vunpack.c.l.b16 %v254
        %v292 = vunpack.c.l.b16 %v255
        %v293 = vunpack.c.l.b16 %v256
        %v294 = vunpack.c.l.b16 %v257
        %v295 = vunpack.c.l.b16 %v258
        %v296 = vunpack.c.l.b16 %v259
        %v297 = vunpack.c.l.b16 %v260
        %v298 = vunpack.c.l.b16 %v261
        %v299 = vunpack.c.l.b16 %v262
        %v300 = vunpack.c.l.b16 %v263
        %v301 = vunpack.c.l.b16 %v264
        %v302 = vunpack.c.l.b16 %v265
        %v303 = vunpack.c.l.b16 %v266
        %v304 = vunpack.c.l.b16 %v267
        %v305 = vunpack.c.l.b16 %v268
        %v306 = vpack.c.b16 %v291, %v290
        %v307 = vpack.c.b16 %v293, %v292
        %v308 = vpack.c.b16 %v295, %v294
        %v309 = vpack.c.b16 %v297, %v296
        %v310 = vpack.c.b16 %v299, %v298
        %v311 = vpack.c.b16 %v301, %v300
        %v312 = vpack.c.b16 %v303, %v302
        %v313 = vpack.c.b16 %v305, %v304
        %322 = vmatpush.bf16.msra.mxu0 %v313
        %323 = vmatpush.bf16.msra.mxu0 %v312
        %324 = vmatpush.bf16.msra.mxu0 %v311
        %325 = vmatpush.bf16.msra.mxu0 %v310
        %326 = vmatpush.bf16.msra.mxu0 %v309
        %327 = vmatpush.bf16.msra.mxu0 %v308
        %328 = vmatpush.bf16.msra.mxu0 %v307
        %329 = vmatpush.bf16.msra.mxu0 %v306
        %330 = vmatmul.bf16.gmra.mxu0 %v269
        %v331 = vpop.f32.mrf.mxu0
        %v332 = vadd.f32 %v272, %v331
        %v333 = vpop.f32.mrf.mxu0
        %v334 = vadd.f32 %v272, %v333
        %335 = vdwg.mxu0
        %v336 = vld [vmem:[#allocation7] sm:$0xff]
        %v337 = vld [vmem:[#allocation7 + $0x8] sm:$0xff]
        %v338 = vadd.f32 %v332, %v336
        %v339 = vadd.f32 %v334, %v337
        %340 = vst [vmem:[%s250] sm:$0xff] %v338
        %341 = vst [vmem:[%s250 + $0x8] sm:$0xff] %v339
        %s342 = sand.u32 %s119, 1
        %s343 = scalar_lea.sflag [#allocation4], %s342
        %s344 = sand.u32 %s119, 1
        %s345 = smul.addr %s344, 16
        %s346 = scalar_lea.vmem [#allocation8], %s345
        // Predicated region
        $region49: #{tpu_custom_call.1} parent=35 // pred_check
          %p347 = pneg %p129
        $region50: #{tpu_custom_call.1} parent=35 // pred_check_branch
          %349 = sbr.rel (%p347) target = $region52
        $region51: #{tpu_custom_call.1} parent=35 // pred_region
          %351 = vsyncadd %s343, 0
          %s352 = smul.addr %s22, 2
          %s353 = smul.addr %s352, 8
          %s354 = scalar_lea.hbm %s4, %s353
          %s355 = sshll.u32 %s346, 4
          %s356 = int_to_ptr.vmem [resolvable:$true] %s355
          %s357 = sshll.u32 %s354, 4
          %s358 = int_to_ptr.hbm [resolvable:$true] %s357
          %363 = dma.vmem_to_hbm [thread:$0]  %s356, 256, %s358, %s343, 128, 128, 8
        $region52: #{tpu_custom_call.1} parent=35 // pred_fallthru
          _
      $region36: #{tpu_custom_call.1} parent=5 // pred_fallthru
        _
      %p364 = scmp.le.s32.totalorder 2, %s17
      // Predicated region
      $region53: #{tpu_custom_call.1} parent=5 // pred_check
        %p365 = pneg %p364
      $region54: #{tpu_custom_call.1} parent=5 // pred_check_branch
        %367 = sbr.rel (%p365) target = $region56
      $region55: #{tpu_custom_call.1} parent=5 // pred_region
        %s368 = ssub.s32 %s17, 2
        // Predicated region
        $region57: #{tpu_custom_call.1} parent=55 // pred_check
          %p369 = pneg %p135
        $region58: #{tpu_custom_call.1} parent=55 // pred_check_branch
          %371 = sbr.rel (%p369) target = $region60
        $region59: #{tpu_custom_call.1} parent=55 // pred_region
          %s372 = sand.u32 %s120, 1
          %s373 = scalar_lea.sflag [#allocation4], %s372
          %s374 = sand.u32 %s120, 1
          %s375 = smul.addr %s374, 16
          %s376 = scalar_lea.vmem [#allocation8], %s375
          %378 = dma.done %s373, 256
        $region60: #{tpu_custom_call.1} parent=55 // pred_fallthru
          _
      $region56: #{tpu_custom_call.1} parent=5 // pred_fallthru
        _
    $region6: #{tpu_custom_call.1} parent=1 // loop_footer
      %s21 = sadd.s32 1, %s17
    $region7: #{tpu_custom_call.1} parent=1 // loop_footer_branch
      %16 = sbr.rel target = $region3
    $region8: #{tpu_custom_call.1} parent=1 // loop_exit
      _
    %379 = vsyncpa [#allocation3], 1
    %s380 = scalar_lea.sflag [#allocation3], 1
    %381 = vsyncpa %s380, 1
    %382 = vsyncpa [#allocation6], 1
    %383 = vsyncpa [#allocation4], 1
    %s384 = scalar_lea.sflag [#allocation4], 1
    %385 = vsyncpa %s384, 1

</llo_original>
